<compile_context>
chip_gen: v7x
topology: tpu7x:2x2x1
jax: 0.10.0
libtpu: 0.0.40
codegen_flags: <defaults>
</compile_context>

<pallas_src>
import functools
import math

import jax
import jax.numpy as jnp
import numpy as np
from jax.experimental import pallas as pl
from jax.experimental.pallas import tpu as pltpu


def dft_kernel(x_ref, w_ref, y_ref, *, use_bf16):
    # x_ref: (TM, K)  packed signal rows (r original rows per packed row)
    # w_ref: (K, 2K)  block-diagonal DFT matrix, columns interleave cos / -sin
    # y_ref: (TM, 2K) interleaved (real, imag) output
    x = x_ref[...]
    if use_bf16:
        # bf16 MXU path: cast the tile in-kernel (no standalone HBM cast pass),
        # accumulate in f32.  Not accurate enough for rtol=1e-4 at moderate W.
        y_ref[...] = jnp.dot(
            x.astype(jnp.bfloat16), w_ref[...],
            preferred_element_type=jnp.float32)
    else:
        # Explicit HIGHEST precision so the f32 result does not depend on the
        # default Mosaic matmul lowering (bf16-pass truncation).
        y_ref[...] = jnp.dot(
            x, w_ref[...],
            preferred_element_type=jnp.float32,
            precision=jax.lax.Precision.HIGHEST)


def _round_up(x: int, m: int) -> int:
    return ((x + m - 1) // m) * m


@functools.lru_cache(maxsize=None)
def _packed_dft_matrix(n: int, r: int):
    """Host-side (r*n, 2*r*n) block-diagonal interleaved DFT matrix (float64).

    Block entry [j, 2k]   =  cos(2*pi*j*k/n)
    Block entry [j, 2k+1] = -sin(2*pi*j*k/n)
    Angles built from (j*k) mod n in float64 so large n stays exact.
    """
    idx = np.arange(n, dtype=np.int64)
    ang = 2.0 * np.pi * (np.outer(idx, idx) % n).astype(np.float64) / float(n)
    blk = np.empty((n, 2 * n), dtype=np.float64)
    blk[:, 0::2] = np.cos(ang)
    blk[:, 1::2] = -np.sin(ang)

    K = r * n
    w = np.zeros((K, 2 * K), dtype=np.float64)
    for b in range(r):
        w[b * n:(b + 1) * n, 2 * b * n:2 * (b + 1) * n] = blk
    return w


def _packing_factor(n: int) -> int:
    """Rows packed per kernel row so the lane dim is a multiple of 128."""
    r = 128 // math.gcd(n, 128)
    # Guard pathological n (e.g. n=100 -> r=32 -> huge resident RHS): fall
    # back to unpacked if the packed width would blow up the DFT matrix.
    if r * n > 1024:
        return 1
    return r
    # TODO(synk): for awkward W where this r=1 fallback leaves K % 128 != 0,
    # zero-pad the contraction dim (x columns / W rows) so loads stay unmasked.


def _vmem_limit_bytes() -> int:
    """Per-generation scoped-VMEM limit (v7x has only 64 MiB per TensorCore)."""
    try:
        kind = jax.devices()[0].device_kind.lower()
    except Exception:  # pragma: no cover - defensive
        kind = ""
    if "v7" in kind or "tpu7" in kind:
        return 48 * 1024 * 1024
    return 64 * 1024 * 1024


def fft_layer(x, use_bf16: bool = False):
    """x: (B, C, H, W) -> (B, C, H, W, 2) float32 (real, imag) of fft(x, -1).

    use_bf16=True uses the bf16 MXU path (f32 accumulate); it will not meet
    rtol=1e-4 / atol=1e-3 for moderate W -- keep False for exact-tolerance use.
    """
    B, C, H, W = x.shape
    n = W
    M = B * C * H

    r = _packing_factor(n)
    K = r * n

    x2 = x.reshape(M, n).astype(jnp.float32)

    # Pack r rows per kernel row; pad rows ONLY when M is not a multiple of r
    # (avoids a full extra HBM copy of x and of the 2x-larger output).
    Mpad = _round_up(M, r)
    padded = Mpad != M
    if padded:
        # TODO(synk): handle the ragged tail with a tiny second pallas_call on
        # the remainder rows instead of padding (and later slicing) everything.
        x2 = jnp.pad(x2, ((0, Mpad - M), (0, 0)))
    MP = Mpad // r
    xp = x2.reshape(MP, K)

    w_dtype = jnp.bfloat16 if use_bf16 else jnp.float32
    w_dft = jnp.asarray(_packed_dft_matrix(n, r), dtype=w_dtype)

    # ---- VMEM-budgeted row tile -----------------------------------------
    vmem_limit = _vmem_limit_bytes()
    budget = (vmem_limit * 3) // 4                      # ~25% headroom
    itemsize_w = jnp.dtype(w_dtype).itemsize
    w_bytes = K * (2 * K) * itemsize_w * 2              # budget 2 bufs (safe)
    per_row = 2 * K * 4 + 2 * (2 * K) * 4               # dbl-buffered x + y
    tm_budget = max(8, (budget - w_bytes) // per_row)
    TM = min(MP, int(tm_budget), 2048)
    if MP >= 16:
        # Keep >=~4 row-grid steps so both TensorCores (v7x) get work and the
        # input/output DMAs overlap compute instead of collapsing to grid=(1,).
        TM = min(TM, max(8, _round_up(pl.cdiv(MP, 4), 8)))
    if TM < MP:
        TM = max(8, (TM // 8) * 8)                      # block rows: mult of 8
    grid = (pl.cdiv(MP, TM),)

    # Resident DFT matrix: constant block index -> single-buffer it.
    try:
        w_spec = pl.BlockSpec((K, 2 * K), lambda i: (0, 0),
                              pipeline_mode=pl.Buffered(1))
    except TypeError:  # older jax without pipeline_mode: keep default buffering
        w_spec = pl.BlockSpec((K, 2 * K), lambda i: (0, 0))

    y = pl.pallas_call(
        functools.partial(dft_kernel, use_bf16=use_bf16),
        out_shape=jax.ShapeDtypeStruct((MP, 2 * K), jnp.float32),
        grid=grid,
        in_specs=[
            pl.BlockSpec((TM, K), lambda i: (i, 0)),    # pipelined row tiles
            w_spec,                                     # resident DFT matrix
        ],
        out_specs=pl.BlockSpec((TM, 2 * K), lambda i: (i, 0)),
        compiler_params=pltpu.CompilerParams(
            dimension_semantics=("parallel",),          # 2 TCs on v7x
            vmem_limit_bytes=vmem_limit,
        ),
    )(xp, w_dft)

    # (MP, 2*r*n) row-major == (Mpad, n, 2): free reshape, no jnp.stack.
    out = y.reshape(Mpad, n, 2)
    if padded:
        out = out[:M]
    return out.reshape(B, C, H, W, 2)
    # TODO(synk): for very large W (>=1024) switch to a factored Cooley-Tukey
    # path (two small DFT matmuls + twiddle) instead of the dense O(W^2) matrix.


if __name__ == "__main__":
    key = jax.random.PRNGKey(0)
    x = jax.random.normal(key, (2, 4, 16, 16), dtype=jnp.float32)

    y = jax.block_until_ready(fft_layer(x))

    # Reference check against jnp.fft.fft (same semantics as torch.fft.fft).
    x_fft = jnp.fft.fft(x, axis=-1)
    y_ref = jnp.stack((jnp.real(x_fft), jnp.imag(x_fft)), axis=-1)
    np.testing.assert_allclose(np.asarray(y), np.asarray(y_ref),
                               rtol=1e-4, atol=1e-3)

    print("KERNEL_OK")
</pallas_src>

<mosaic_0001>
module attributes {stable_mosaic.version = 11 : i64} {
  func.func @dft_kernel(%arg0: i32, %arg1: memref<8x128xf32, #tpu.memory_space<vmem>>, %arg2: memref<128x256xf32, #tpu.memory_space<vmem>>, %arg3: memref<8x256xf32, #tpu.memory_space<vmem>>) attributes {dimension_semantics = [#tpu.dimension_semantics<parallel>], iteration_bounds = array<i64: 2>, scalar_prefetch = 0 : i64, scratch_operands = 0 : i64, tpu.core_type = #tpu.core_type<tc>, window_params = [{transform_indices = @transform_0, window_bounds = array<i64: 8, 128>}, {pipeline_mode = #tpu.pipeline_mode<synchronous>, transform_indices = @transform_1, window_bounds = array<i64: 128, 256>}, {transform_indices = @transform_2, window_bounds = array<i64: 8, 256>}]} {
    %c0 = arith.constant 0 : index
    %c0_0 = arith.constant 0 : index
    %0 = vector.load %arg1[%c0, %c0_0] : memref<8x128xf32, #tpu.memory_space<vmem>>, vector<8x128xf32>
    %c0_1 = arith.constant 0 : index
    %c0_2 = arith.constant 0 : index
    %1 = vector.load %arg2[%c0_1, %c0_2] : memref<128x256xf32, #tpu.memory_space<vmem>>, vector<128x256xf32>
    %cst = arith.constant dense<0.000000e+00> : vector<8x256xf32>
    %2 = tpu.matmul %0, %1, %cst {dimension_numbers = #tpu.dot_dimension_numbers<[1], [0], [0], [1], [0, 0, 1, 1], [], []>, precision = #tpu.contract_precision<fp32>} : vector<8x128xf32>, vector<128x256xf32>, vector<8x256xf32> -> vector<8x256xf32>
    %c0_3 = arith.constant 0 : index
    %c0_4 = arith.constant 0 : index
    %3 = vector.load %arg3[%c0_3, %c0_4] : memref<8x256xf32, #tpu.memory_space<vmem>>, vector<8x256xf32>
    tpu.vector_store %arg3[%c0_3, %c0_4], %2 {strides = array<i32>} : memref<8x256xf32, #tpu.memory_space<vmem>>, vector<8x256xf32>,
    return
  }
  func.func @transform_0(%arg0: i32) -> (i32, i32) {
    %c0_i32 = arith.constant 0 : i32
    %c0_i32_0 = arith.constant 0 : i32
    return %arg0, %c0_i32 : i32, i32
  }
  func.func @transform_1(%arg0: i32) -> (i32, i32) {
    %c0_i32 = arith.constant 0 : i32
    %c0_i32_0 = arith.constant 0 : i32
    %c0_i32_1 = arith.constant 0 : i32
    return %c0_i32, %c0_i32_0 : i32, i32
  }
  func.func @transform_2(%arg0: i32) -> (i32, i32) {
    %c0_i32 = arith.constant 0 : i32
    %c0_i32_0 = arith.constant 0 : i32
    return %arg0, %c0_i32 : i32, i32
  }
}

</mosaic_0001>

<llo_original>
// kernel: tpu_custom_call.1
$region0: #{tpu_custom_call.1}
  #allocation0 [shape = 'u32[]', space=smem, size = 0x4, offset = 0x4, fixed_abs, tag = 'smem constant byte address 0x4 - core index']
  #allocation1 [shape = 'u32[144,128]{1,0:T(1,128)}', space=vmem, size = 0x12000, scoped, tag = 'internal scratch']
  %s0 = inlined_call_operand.hbm [shape: f32[16,128], index: 0, kind: input, shape index: {}]
  %s1 = inlined_call_operand.hbm [shape: f32[128,256], index: 1, kind: input, shape index: {}]
  %s2 = inlined_call_operand.hbm [shape: f32[16,256], index: 2, kind: output, shape index: {}]
  %s3 = sld [smem:[#allocation0]]
  $region49: #{tpu_custom_call.1} parent=0
    _
  %s5 = ssub.s32 1, %s3
  %s6 = scalar_select 0, %s5, %s3
  $region1: #{tpu_custom_call.1} parent=0
    #allocation2 [shape = 'u8[8192]{0}', space=vmem, size = 0x2000, scoped, tag = 'input window, operand 0']
    #allocation3 [shape = 's32[2]{0}', space=sflag, size = 0x8, scoped, tag = 'scoped memory for tpu_custom_call.1']
    #allocation4 [shape = 's32[2]{0}', space=sflag, size = 0x8, scoped, tag = 'scoped memory for tpu_custom_call.1']
    #allocation5 [shape = 'u8[131072]{0}', space=vmem, size = 0x20000, scoped, tag = 'input window, operand 1, single buffered']
    #allocation6 [shape = 's32[1]{0}', space=sflag, size = 0x4, scoped, tag = 'scoped memory for tpu_custom_call.1']
    #allocation7 [shape = 'u8[16384]{0}', space=vmem, size = 0x4000, scoped, tag = 'output window, operand 0']
    %7 = vsyncpa [#allocation3], 0
    %s8 = scalar_lea.sflag [#allocation3], 1
    %9 = vsyncpa %s8, 0
    %10 = vsyncpa [#allocation6], 0
    %11 = vsyncpa [#allocation4], 0
    %s12 = scalar_lea.sflag [#allocation4], 1
    %13 = vsyncpa %s12, 0
    loop: start=0, step=1, limit=4
    $region2: #{tpu_custom_call.1} parent=1 // loop_pre_header
      _
    $region3: #{tpu_custom_call.1} parent=1 // loop_header
      %s15 = sphi 0, %s19
      %p16 = scmp.ge.s32.totalorder %s15, 4
      %s25 = sphi 0, %s27
      %s28 = sphi 0, %s25
      %s29 = sphi 0, %s28
      %s45 = sphi 0, %s29
      %s49 = sphi 0, %s49
      %s51 = sphi 0, %s49
      %s52 = sphi 0, %s51
      %s66 = sphi 0, %s52
      %s72 = sphi 0, %s74
      %s75 = sphi 0, %s72
      %s76 = sphi 0, %s75
      %s92 = sphi 0, %s76
    $region4: #{tpu_custom_call.1} parent=1 // loop_header_branch
      %18 = sbr.rel (%p16) target = $region8
    $region5: #{tpu_custom_call.1} parent=1 // loop_body
      %s20 = ssub.s32 %s15, 1
      %s21 = ssub.s32 %s15, 2
      %s22 = sadd.s32 %s15, 1
      %s23 = ssub.s32 %s15, %s22
      %p24 = scmp.eq.s32.totalorder %s23, 0
      %s26 = sadd.s32 %s25, 1
      %s27 = scalar_select %p24, %s25, %s26
      %p30 = pneg %p24
      %p31 = scmp.eq.s32.totalorder %s15, 1
      %p32 = por %p30, %p31
      %p33 = scmp.ne.s32.totalorder %s25, %s28
      %p34 = scmp.eq.s32.totalorder %s15, 0
      %p35 = por %p33, %p34
      %p36 = scmp.ne.s32.totalorder %s25, %s28
      %p37 = scmp.eq.s32.totalorder %s20, 1
      %p38 = por %p36, %p37
      %p39 = scmp.ne.s32.totalorder %s28, %s29
      %p40 = scmp.eq.s32.totalorder %s20, 0
      %p41 = por %p39, %p40
      %p42 = scmp.ne.s32.totalorder %s28, %s29
      %p43 = scmp.eq.s32.totalorder %s21, 1
      %p44 = por %p42, %p43
      %p46 = scmp.ne.s32.totalorder %s29, %s45
      %p47 = scmp.eq.s32.totalorder %s21, 0
      %p48 = por %p46, %p47
      %s50 = sadd.s32 %s49, 1
      %p53 = scmp.eq.s32.totalorder %s15, 1
      %p54 = scmp.ne.s32.totalorder %s49, %s51
      %p55 = scmp.eq.s32.totalorder %s15, 0
      %p56 = por %p54, %p55
      %p57 = scmp.ne.s32.totalorder %s49, %s51
      %p58 = scmp.eq.s32.totalorder %s20, 1
      %p59 = por %p57, %p58
      %p60 = scmp.ne.s32.totalorder %s51, %s52
      %p61 = scmp.eq.s32.totalorder %s20, 0
      %p62 = por %p60, %p61
      %p63 = scmp.ne.s32.totalorder %s51, %s52
      %p64 = scmp.eq.s32.totalorder %s21, 1
      %p65 = por %p63, %p64
      %p67 = scmp.ne.s32.totalorder %s52, %s66
      %p68 = scmp.eq.s32.totalorder %s21, 0
      %p69 = por %p67, %p68
      %s70 = ssub.s32 %s15, %s22
      %p71 = scmp.eq.s32.totalorder %s70, 0
      %s73 = sadd.s32 %s72, 1
      %s74 = scalar_select %p71, %s72, %s73
      %p77 = pneg %p71
      %p78 = scmp.eq.s32.totalorder %s15, 1
      %p79 = por %p77, %p78
      %p80 = scmp.ne.s32.totalorder %s72, %s75
      %p81 = scmp.eq.s32.totalorder %s15, 0
      %p82 = por %p80, %p81
      %p83 = scmp.ne.s32.totalorder %s72, %s75
      %p84 = scmp.eq.s32.totalorder %s20, 1
      %p85 = por %p83, %p84
      %p86 = scmp.ne.s32.totalorder %s75, %s76
      %p87 = scmp.eq.s32.totalorder %s20, 0
      %p88 = por %p86, %p87
      %p89 = scmp.ne.s32.totalorder %s75, %s76
      %p90 = scmp.eq.s32.totalorder %s21, 1
      %p91 = por %p89, %p90
      %p93 = scmp.ne.s32.totalorder %s76, %s92
      %p94 = scmp.eq.s32.totalorder %s21, 0
      %p95 = por %p93, %p94
      %p96 = scmp.le.s32.totalorder 1, %s15
      %p97 = scmp.lt.s32.totalorder %s15, 3
      %p98 = pnand %p96, %p97
      %p99 = pneg %p98
      // Predicated region
      $region9: #{tpu_custom_call.1} parent=5 // pred_check
        _
      $region10: #{tpu_custom_call.1} parent=5 // pred_check_branch
        %101 = sbr.rel (%p98) target = $region12
      $region11: #{tpu_custom_call.1} parent=5 // pred_region
        %s102 = ssub.s32 %s15, 1
        // Predicated region
        $region13: #{tpu_custom_call.1} parent=11 // pred_check
          %p103 = pneg %p62
        $region14: #{tpu_custom_call.1} parent=11 // pred_check_branch
          %105 = sbr.rel (%p103) target = $region16
        $region15: #{tpu_custom_call.1} parent=11 // pred_region
          %s107 = ssub.s32 4096, 4096
          %108 = vsyncadd [#allocation6], %s107
          %s109 = sshll.u32 [#allocation5], 4
          %s110 = int_to_ptr.vmem [resolvable:$true] %s109
          %115 = dma.hbm_to_vmem [thread:$0]  %s1, 4096, %s110, [#allocation6], 256, 256, 16
        $region16: #{tpu_custom_call.1} parent=11 // pred_fallthru
          _
      $region12: #{tpu_custom_call.1} parent=5 // pred_fallthru
        _
      %p116 = scmp.lt.s32.totalorder %s15, 2
      // Predicated region
      $region17: #{tpu_custom_call.1} parent=5 // pred_check
        %p117 = pneg %p116
      $region18: #{tpu_custom_call.1} parent=5 // pred_check_branch
        %119 = sbr.rel (%p117) target = $region20
      $region19: #{tpu_custom_call.1} parent=5 // pred_region
        // Predicated region
        $region21: #{tpu_custom_call.1} parent=19 // pred_check
          %p120 = pneg %p35
        $region22: #{tpu_custom_call.1} parent=19 // pred_check_branch
          %122 = sbr.rel (%p120) target = $region24
        $region23: #{tpu_custom_call.1} parent=19 // pred_region
          %s123 = sand.u32 %s25, 1
          %s124 = scalar_lea.sflag [#allocation3], %s123
          %s125 = sand.u32 %s25, 1
          %s126 = smul.addr %s125, 8
          %s127 = scalar_lea.vmem [#allocation2], %s126
          %s129 = ssub.s32 128, 128
          %130 = vsyncadd %s124, %s129
          %s131 = smul.addr %s15, 128
          %s132 = scalar_lea.hbm %s0, %s131
          %s134 = sshll.u32 %s127, 4
          %s135 = int_to_ptr.vmem [resolvable:$true] %s134
          %137 = dma.hbm_to_vmem [thread:$0]  %s132, 128, %s135, %s124
        $region24: #{tpu_custom_call.1} parent=19 // pred_fallthru
          _
      $region20: #{tpu_custom_call.1} parent=5 // pred_fallthru
        _
      %p138 = scmp.le.s32.totalorder 1, %s15
      %p139 = scmp.lt.s32.totalorder %s15, 3
      %p140 = pnand %p138, %p139
      %p141 = pneg %p140
      // Predicated region
      $region25: #{tpu_custom_call.1} parent=5 // pred_check
        _
      $region26: #{tpu_custom_call.1} parent=5 // pred_check_branch
        %143 = sbr.rel (%p140) target = $region28
      $region27: #{tpu_custom_call.1} parent=5 // pred_region
        %s144 = ssub.s32 %s15, 1
        %s145 = sand.u32 %s28, 1
        %s146 = scalar_lea.sflag [#allocation3], %s145
        %s147 = sand.u32 %s28, 1
        %s148 = smul.addr %s147, 8
        %s149 = scalar_lea.vmem [#allocation2], %s148
        // Predicated region
        $region29: #{tpu_custom_call.1} parent=27 // pred_check
          %p150 = pneg %p41
        $region30: #{tpu_custom_call.1} parent=27 // pred_check_branch
          %152 = sbr.rel (%p150) target = $region32
        $region31: #{tpu_custom_call.1} parent=27 // pred_region
          %153 = dma.done %s146, 128
        $region32: #{tpu_custom_call.1} parent=27 // pred_fallthru
          _
        // Predicated region
        $region33: #{tpu_custom_call.1} parent=27 // pred_check
          %p154 = pneg %p62
        $region34: #{tpu_custom_call.1} parent=27 // pred_check_branch
          %156 = sbr.rel (%p154) target = $region36
        $region35: #{tpu_custom_call.1} parent=27 // pred_region
          %157 = dma.done [#allocation6], 4096
        $region36: #{tpu_custom_call.1} parent=27 // pred_fallthru
          _
        %s158 = sand.u32 %s28, 1
        %s159 = scalar_lea.sflag [#allocation3], %s158
        %s160 = sand.u32 %s28, 1
        %s161 = smul.addr %s160, 8
        %s162 = scalar_lea.vmem [#allocation2], %s161
        %p163 = pneg %p41
        %p164 = pneg %p38
        %p165 = pneg %p62
        %p166 = pneg %p59
        %p167 = pneg %p88
        %p168 = pneg %p85
        %s169 = sand.u32 %s75, 1
        %s170 = scalar_lea.sflag [#allocation4], %s169
        %s171 = sand.u32 %s75, 1
        %s172 = smul.addr %s171, 16
        %s173 = scalar_lea.vmem [#allocation7], %s172
        %v174 = vld [vmem:[%s149] sm:$0xff]
        %v175 = vld [vmem:[#allocation5] sm:$0xff]
        %v176 = vld [vmem:[#allocation5 + $0x8] sm:$0xff]
        %v177 = vld [vmem:[#allocation5 + $0x10] sm:$0xff]
        %v178 = vld [vmem:[#allocation5 + $0x18] sm:$0xff]
        %v179 = vld [vmem:[#allocation5 + $0x20] sm:$0xff]
        %v180 = vld [vmem:[#allocation5 + $0x28] sm:$0xff]
        %v181 = vld [vmem:[#allocation5 + $0x30] sm:$0xff]
        %v182 = vld [vmem:[#allocation5 + $0x38] sm:$0xff]
        %v183 = vld [vmem:[#allocation5 + $0x40] sm:$0xff]
        %v184 = vld [vmem:[#allocation5 + $0x48] sm:$0xff]
        %v185 = vld [vmem:[#allocation5 + $0x50] sm:$0xff]
        %v186 = vld [vmem:[#allocation5 + $0x58] sm:$0xff]
        %v187 = vld [vmem:[#allocation5 + $0x60] sm:$0xff]
        %v188 = vld [vmem:[#allocation5 + $0x68] sm:$0xff]
        %v189 = vld [vmem:[#allocation5 + $0x70] sm:$0xff]
        %v190 = vld [vmem:[#allocation5 + $0x78] sm:$0xff]
        %v191 = vld [vmem:[#allocation5 + $0x80] sm:$0xff]
        %v192 = vld [vmem:[#allocation5 + $0x88] sm:$0xff]
        %v193 = vld [vmem:[#allocation5 + $0x90] sm:$0xff]
        %v194 = vld [vmem:[#allocation5 + $0x98] sm:$0xff]
        %v195 = vld [vmem:[#allocation5 + $0xa0] sm:$0xff]
        %v196 = vld [vmem:[#allocation5 + $0xa8] sm:$0xff]
        %v197 = vld [vmem:[#allocation5 + $0xb0] sm:$0xff]
        %v198 = vld [vmem:[#allocation5 + $0xb8] sm:$0xff]
        %v199 = vld [vmem:[#allocation5 + $0xc0] sm:$0xff]
        %v200 = vld [vmem:[#allocation5 + $0xc8] sm:$0xff]
        %v201 = vld [vmem:[#allocation5 + $0xd0] sm:$0xff]
        %v202 = vld [vmem:[#allocation5 + $0xd8] sm:$0xff]
        %v203 = vld [vmem:[#allocation5 + $0xe0] sm:$0xff]
        %v204 = vld [vmem:[#allocation5 + $0xe8] sm:$0xff]
        %v205 = vld [vmem:[#allocation5 + $0xf0] sm:$0xff]
        %v206 = vld [vmem:[#allocation5 + $0xf8] sm:$0xff]
        %v207 = vand.u32 %v176, 4294901760
        %208 = vmatprep.subr.mxu0 %v207
        %v209 = vand.u32 %v175, 4294901760
        %210 = vmatpush1.msra.mxu0 %v209
        %v211 = vand.u32 %v178, 4294901760
        %212 = vmatprep.subr.mxu0 %v211
        %v213 = vand.u32 %v177, 4294901760
        %214 = vmatpush1.msra.mxu0 %v213
        %v215 = vand.u32 %v180, 4294901760
        %216 = vmatprep.subr.mxu0 %v215
        %v217 = vand.u32 %v179, 4294901760
        %218 = vmatpush1.msra.mxu0 %v217
        %v219 = vand.u32 %v182, 4294901760
        %220 = vmatprep.subr.mxu0 %v219
        %v221 = vand.u32 %v181, 4294901760
        %222 = vmatpush1.msra.mxu0 %v221
        %v223 = vand.u32 %v184, 4294901760
        %224 = vmatprep.subr.mxu0 %v223
        %v225 = vand.u32 %v183, 4294901760
        %226 = vmatpush1.msra.mxu0 %v225
        %v227 = vand.u32 %v186, 4294901760
        %228 = vmatprep.subr.mxu0 %v227
        %v229 = vand.u32 %v185, 4294901760
        %230 = vmatpush1.msra.mxu0 %v229
        %v231 = vand.u32 %v188, 4294901760
        %232 = vmatprep.subr.mxu0 %v231
        %v233 = vand.u32 %v187, 4294901760
        %234 = vmatpush1.msra.mxu0 %v233
        %v235 = vand.u32 %v190, 4294901760
        %236 = vmatprep.subr.mxu0 %v235
        %v237 = vand.u32 %v189, 4294901760
        %238 = vmatpush1.msra.mxu0 %v237
        %v239 = vand.u32 %v192, 4294901760
        %240 = vmatprep.subr.mxu0 %v239
        %v241 = vand.u32 %v191, 4294901760
        %242 = vmatpush1.msra.mxu0 %v241
        %v243 = vand.u32 %v194, 4294901760
        %244 = vmatprep.subr.mxu0 %v243
        %v245 = vand.u32 %v193, 4294901760
        %246 = vmatpush1.msra.mxu0 %v245
        %v247 = vand.u32 %v196, 4294901760
        %248 = vmatprep.subr.mxu0 %v247
        %v249 = vand.u32 %v195, 4294901760
        %250 = vmatpush1.msra.mxu0 %v249
        %v251 = vand.u32 %v198, 4294901760
        %252 = vmatprep.subr.mxu0 %v251
        %v253 = vand.u32 %v197, 4294901760
        %254 = vmatpush1.msra.mxu0 %v253
        %v255 = vand.u32 %v200, 4294901760
        %256 = vmatprep.subr.mxu0 %v255
        %v257 = vand.u32 %v199, 4294901760
        %258 = vmatpush1.msra.mxu0 %v257
        %v259 = vand.u32 %v202, 4294901760
        %260 = vmatprep.subr.mxu0 %v259
        %v261 = vand.u32 %v201, 4294901760
        %262 = vmatpush1.msra.mxu0 %v261
        %v263 = vand.u32 %v204, 4294901760
        %264 = vmatprep.subr.mxu0 %v263
        %v265 = vand.u32 %v203, 4294901760
        %266 = vmatpush1.msra.mxu0 %v265
        %v267 = vand.u32 %v206, 4294901760
        %268 = vmatprep.subr.mxu0 %v267
        %v269 = vand.u32 %v205, 4294901760
        %270 = vmatpush1.msra.mxu0 %v269
        %271 = vmatprep.subr.mxu0 0.0
        %272 = vmatpush1.msra.mxu0 0.0
        %273 = vmatprep.subr.mxu0 0.0
        %274 = vmatpush1.msra.mxu0 0.0
        %275 = vmatprep.subr.mxu0 0.0
        %276 = vmatpush1.msra.mxu0 0.0
        %277 = vmatprep.subr.mxu0 0.0
        %278 = vmatpush1.msra.mxu0 0.0
        %279 = vmatprep.subr.mxu0 0.0
        %280 = vmatpush1.msra.mxu0 0.0
        %281 = vmatprep.subr.mxu0 0.0
        %282 = vmatpush1.msra.mxu0 0.0
        %283 = vmatprep.subr.mxu0 0.0
        %284 = vmatpush1.msra.mxu0 0.0
        %285 = vmatprep.subr.mxu0 0.0
        %286 = vmatpush1.msra.mxu0 0.0
        %287 = vmatprep.subr.mxu0 0.0
        %288 = vmatpush1.msra.mxu0 0.0
        %289 = vmatprep.subr.mxu0 0.0
        %290 = vmatpush1.msra.mxu0 0.0
        %291 = vmatprep.subr.mxu0 0.0
        %292 = vmatpush1.msra.mxu0 0.0
        %293 = vmatprep.subr.mxu0 0.0
        %294 = vmatpush1.msra.mxu0 0.0
        %295 = vmatprep.subr.mxu0 0.0
        %296 = vmatpush1.msra.mxu0 0.0
        %297 = vmatprep.subr.mxu0 0.0
        %298 = vmatpush1.msra.mxu0 0.0
        %299 = vmatprep.subr.mxu0 0.0
        %300 = vmatpush1.msra.mxu0 0.0
        %301 = vmatprep.subr.mxu0 0.0
        %302 = vmatpush1.msra.mxu0 0.0
        %303 = vmatprep.mubr.f32.mxu0 0.0
        %v304 = vand.u32 %v174, 4294901760
        %v305 = vsub.f32 %v174, %v304
        %v306 = vand.u32 %v305, 4294901760
        %v307 = vsub.f32 %v305, %v306
        %v308 = vand.u32 %v307, 4294901760
        %309 = vmatmul.mubr.f32.gmra.mrb[0].mxu0 %v308
        %v310 = vpop.f32.mrb[0].mxu0
        %v311 = vadd.f32 0.0, %v310
        %v312 = vpop.f32.mrb[0].mxu0
        %v313 = vadd.f32 0.0, %v312
        %314 = vdwg.mxu0
        %v315 = vand.u32 %v176, 4294901760
        %v316 = vsub.f32 %v176, %v315
        %v317 = vand.u32 %v316, 4294901760
        %v318 = vsub.f32 %v316, %v317
        %v319 = vand.u32 %v318, 4294901760
        %320 = vmatprep.subr.mxu0 %v319
        %v321 = vand.u32 %v175, 4294901760
        %v322 = vsub.f32 %v175, %v321
        %v323 = vand.u32 %v322, 4294901760
        %v324 = vsub.f32 %v322, %v323
        %v325 = vand.u32 %v324, 4294901760
        %326 = vmatpush1.msra.mxu0 %v325
        %v327 = vand.u32 %v178, 4294901760
        %v328 = vsub.f32 %v178, %v327
        %v329 = vand.u32 %v328, 4294901760
        %v330 = vsub.f32 %v328, %v329
        %v331 = vand.u32 %v330, 4294901760
        %332 = vmatprep.subr.mxu0 %v331
        %v333 = vand.u32 %v177, 4294901760
        %v334 = vsub.f32 %v177, %v333
        %v335 = vand.u32 %v334, 4294901760
        %v336 = vsub.f32 %v334, %v335
        %v337 = vand.u32 %v336, 4294901760
        %338 = vmatpush1.msra.mxu0 %v337
        %v339 = vand.u32 %v180, 4294901760
        %v340 = vsub.f32 %v180, %v339
        %v341 = vand.u32 %v340, 4294901760
        %v342 = vsub.f32 %v340, %v341
        %v343 = vand.u32 %v342, 4294901760
        %344 = vmatprep.subr.mxu0 %v343
        %v345 = vand.u32 %v179, 4294901760
        %v346 = vsub.f32 %v179, %v345
        %v347 = vand.u32 %v346, 4294901760
        %v348 = vsub.f32 %v346, %v347
        %v349 = vand.u32 %v348, 4294901760
        %350 = vmatpush1.msra.mxu0 %v349
        %v351 = vand.u32 %v182, 4294901760
        %v352 = vsub.f32 %v182, %v351
        %v353 = vand.u32 %v352, 4294901760
        %v354 = vsub.f32 %v352, %v353
        %v355 = vand.u32 %v354, 4294901760
        %356 = vmatprep.subr.mxu0 %v355
        %v357 = vand.u32 %v181, 4294901760
        %v358 = vsub.f32 %v181, %v357
        %v359 = vand.u32 %v358, 4294901760
        %v360 = vsub.f32 %v358, %v359
        %v361 = vand.u32 %v360, 4294901760
        %362 = vmatpush1.msra.mxu0 %v361
        %v363 = vand.u32 %v184, 4294901760
        %v364 = vsub.f32 %v184, %v363
        %v365 = vand.u32 %v364, 4294901760
        %v366 = vsub.f32 %v364, %v365
        %v367 = vand.u32 %v366, 4294901760
        %368 = vmatprep.subr.mxu0 %v367
        %v369 = vand.u32 %v183, 4294901760
        %v370 = vsub.f32 %v183, %v369
        %v371 = vand.u32 %v370, 4294901760
        %v372 = vsub.f32 %v370, %v371
        %v373 = vand.u32 %v372, 4294901760
        %374 = vmatpush1.msra.mxu0 %v373
        %v375 = vand.u32 %v186, 4294901760
        %v376 = vsub.f32 %v186, %v375
        %v377 = vand.u32 %v376, 4294901760
        %v378 = vsub.f32 %v376, %v377
        %v379 = vand.u32 %v378, 4294901760
        %380 = vmatprep.subr.mxu0 %v379
        %v381 = vand.u32 %v185, 4294901760
        %v382 = vsub.f32 %v185, %v381
        %v383 = vand.u32 %v382, 4294901760
        %v384 = vsub.f32 %v382, %v383
        %v385 = vand.u32 %v384, 4294901760
        %386 = vmatpush1.msra.mxu0 %v385
        %v387 = vand.u32 %v188, 4294901760
        %v388 = vsub.f32 %v188, %v387
        %v389 = vand.u32 %v388, 4294901760
        %v390 = vsub.f32 %v388, %v389
        %v391 = vand.u32 %v390, 4294901760
        %392 = vmatprep.subr.mxu0 %v391
        %v393 = vand.u32 %v187, 4294901760
        %v394 = vsub.f32 %v187, %v393
        %v395 = vand.u32 %v394, 4294901760
        %v396 = vsub.f32 %v394, %v395
        %v397 = vand.u32 %v396, 4294901760
        %398 = vmatpush1.msra.mxu0 %v397
        %v399 = vand.u32 %v190, 4294901760
        %v400 = vsub.f32 %v190, %v399
        %v401 = vand.u32 %v400, 4294901760
        %v402 = vsub.f32 %v400, %v401
        %v403 = vand.u32 %v402, 4294901760
        %404 = vmatprep.subr.mxu0 %v403
        %v405 = vand.u32 %v189, 4294901760
        %v406 = vsub.f32 %v189, %v405
        %v407 = vand.u32 %v406, 4294901760
        %v408 = vsub.f32 %v406, %v407
        %v409 = vand.u32 %v408, 4294901760
        %410 = vmatpush1.msra.mxu0 %v409
        %v411 = vand.u32 %v192, 4294901760
        %v412 = vsub.f32 %v192, %v411
        %v413 = vand.u32 %v412, 4294901760
        %v414 = vsub.f32 %v412, %v413
        %v415 = vand.u32 %v414, 4294901760
        %416 = vmatprep.subr.mxu0 %v415
        %v417 = vand.u32 %v191, 4294901760
        %v418 = vsub.f32 %v191, %v417
        %v419 = vand.u32 %v418, 4294901760
        %v420 = vsub.f32 %v418, %v419
        %v421 = vand.u32 %v420, 4294901760
        %422 = vmatpush1.msra.mxu0 %v421
        %v423 = vand.u32 %v194, 4294901760
        %v424 = vsub.f32 %v194, %v423
        %v425 = vand.u32 %v424, 4294901760
        %v426 = vsub.f32 %v424, %v425
        %v427 = vand.u32 %v426, 4294901760
        %428 = vmatprep.subr.mxu0 %v427
        %v429 = vand.u32 %v193, 4294901760
        %v430 = vsub.f32 %v193, %v429
        %v431 = vand.u32 %v430, 4294901760
        %v432 = vsub.f32 %v430, %v431
        %v433 = vand.u32 %v432, 4294901760
        %434 = vmatpush1.msra.mxu0 %v433
        %v435 = vand.u32 %v196, 4294901760
        %v436 = vsub.f32 %v196, %v435
        %v437 = vand.u32 %v436, 4294901760
        %v438 = vsub.f32 %v436, %v437
        %v439 = vand.u32 %v438, 4294901760
        %440 = vmatprep.subr.mxu0 %v439
        %v441 = vand.u32 %v195, 4294901760
        %v442 = vsub.f32 %v195, %v441
        %v443 = vand.u32 %v442, 4294901760
        %v444 = vsub.f32 %v442, %v443
        %v445 = vand.u32 %v444, 4294901760
        %446 = vmatpush1.msra.mxu0 %v445
        %v447 = vand.u32 %v198, 4294901760
        %v448 = vsub.f32 %v198, %v447
        %v449 = vand.u32 %v448, 4294901760
        %v450 = vsub.f32 %v448, %v449
        %v451 = vand.u32 %v450, 4294901760
        %452 = vmatprep.subr.mxu0 %v451
        %v453 = vand.u32 %v197, 4294901760
        %v454 = vsub.f32 %v197, %v453
        %v455 = vand.u32 %v454, 4294901760
        %v456 = vsub.f32 %v454, %v455
        %v457 = vand.u32 %v456, 4294901760
        %458 = vmatpush1.msra.mxu0 %v457
        %v459 = vand.u32 %v200, 4294901760
        %v460 = vsub.f32 %v200, %v459
        %v461 = vand.u32 %v460, 4294901760
        %v462 = vsub.f32 %v460, %v461
        %v463 = vand.u32 %v462, 4294901760
        %464 = vmatprep.subr.mxu0 %v463
        %v465 = vand.u32 %v199, 4294901760
        %v466 = vsub.f32 %v199, %v465
        %v467 = vand.u32 %v466, 4294901760
        %v468 = vsub.f32 %v466, %v467
        %v469 = vand.u32 %v468, 4294901760
        %470 = vmatpush1.msra.mxu0 %v469
        %v471 = vand.u32 %v202, 4294901760
        %v472 = vsub.f32 %v202, %v471
        %v473 = vand.u32 %v472, 4294901760
        %v474 = vsub.f32 %v472, %v473
        %v475 = vand.u32 %v474, 4294901760
        %476 = vmatprep.subr.mxu0 %v475
        %v477 = vand.u32 %v201, 4294901760
        %v478 = vsub.f32 %v201, %v477
        %v479 = vand.u32 %v478, 4294901760
        %v480 = vsub.f32 %v478, %v479
        %v481 = vand.u32 %v480, 4294901760
        %482 = vmatpush1.msra.mxu0 %v481
        %v483 = vand.u32 %v204, 4294901760
        %v484 = vsub.f32 %v204, %v483
        %v485 = vand.u32 %v484, 4294901760
        %v486 = vsub.f32 %v484, %v485
        %v487 = vand.u32 %v486, 4294901760
        %488 = vmatprep.subr.mxu0 %v487
        %v489 = vand.u32 %v203, 4294901760
        %v490 = vsub.f32 %v203, %v489
        %v491 = vand.u32 %v490, 4294901760
        %v492 = vsub.f32 %v490, %v491
        %v493 = vand.u32 %v492, 4294901760
        %494 = vmatpush1.msra.mxu0 %v493
        %v495 = vand.u32 %v206, 4294901760
        %v496 = vsub.f32 %v206, %v495
        %v497 = vand.u32 %v496, 4294901760
        %v498 = vsub.f32 %v496, %v497
        %v499 = vand.u32 %v498, 4294901760
        %500 = vmatprep.subr.mxu0 %v499
        %v501 = vand.u32 %v205, 4294901760
        %v502 = vsub.f32 %v205, %v501
        %v503 = vand.u32 %v502, 4294901760
        %v504 = vsub.f32 %v502, %v503
        %v505 = vand.u32 %v504, 4294901760
        %506 = vmatpush1.msra.mxu0 %v505
        %507 = vmatprep.subr.mxu0 0.0
        %508 = vmatpush1.msra.mxu0 0.0
        %509 = vmatprep.subr.mxu0 0.0
        %510 = vmatpush1.msra.mxu0 0.0
        %511 = vmatprep.subr.mxu0 0.0
        %512 = vmatpush1.msra.mxu0 0.0
        %513 = vmatprep.subr.mxu0 0.0
        %514 = vmatpush1.msra.mxu0 0.0
        %515 = vmatprep.subr.mxu0 0.0
        %516 = vmatpush1.msra.mxu0 0.0
        %517 = vmatprep.subr.mxu0 0.0
        %518 = vmatpush1.msra.mxu0 0.0
        %519 = vmatprep.subr.mxu0 0.0
        %520 = vmatpush1.msra.mxu0 0.0
        %521 = vmatprep.subr.mxu0 0.0
        %522 = vmatpush1.msra.mxu0 0.0
        %523 = vmatprep.subr.mxu0 0.0
        %524 = vmatpush1.msra.mxu0 0.0
        %525 = vmatprep.subr.mxu0 0.0
        %526 = vmatpush1.msra.mxu0 0.0
        %527 = vmatprep.subr.mxu0 0.0
        %528 = vmatpush1.msra.mxu0 0.0
        %529 = vmatprep.subr.mxu0 0.0
        %530 = vmatpush1.msra.mxu0 0.0
        %531 = vmatprep.subr.mxu0 0.0
        %532 = vmatpush1.msra.mxu0 0.0
        %533 = vmatprep.subr.mxu0 0.0
        %534 = vmatpush1.msra.mxu0 0.0
        %535 = vmatprep.subr.mxu0 0.0
        %536 = vmatpush1.msra.mxu0 0.0
        %537 = vmatprep.subr.mxu0 0.0
        %538 = vmatpush1.msra.mxu0 0.0
        %539 = vmatprep.mubr.f32.mxu0 0.0
        %v540 = vand.u32 %v174, 4294901760
        %541 = vmatmul.mubr.f32.gmra.mrb[0].mxu0 %v540
        %v542 = vpop.f32.mrb[0].mxu0
        %v543 = vadd.f32 %v311, %v542
        %v544 = vpop.f32.mrb[0].mxu0
        %v545 = vadd.f32 %v313, %v544
        %546 = vdwg.mxu0
        %v547 = vand.u32 %v176, 4294901760
        %v548 = vsub.f32 %v176, %v547
        %549 = vmatprep.subr.mxu0 %v548
        %v550 = vand.u32 %v175, 4294901760
        %v551 = vsub.f32 %v175, %v550
        %552 = vmatpush1.msra.mxu0 %v551
        %v553 = vand.u32 %v178, 4294901760
        %v554 = vsub.f32 %v178, %v553
        %555 = vmatprep.subr.mxu0 %v554
        %v556 = vand.u32 %v177, 4294901760
        %v557 = vsub.f32 %v177, %v556
        %558 = vmatpush1.msra.mxu0 %v557
        %v559 = vand.u32 %v180, 4294901760
        %v560 = vsub.f32 %v180, %v559
        %561 = vmatprep.subr.mxu0 %v560
        %v562 = vand.u32 %v179, 4294901760
        %v563 = vsub.f32 %v179, %v562
        %564 = vmatpush1.msra.mxu0 %v563
        %v565 = vand.u32 %v182, 4294901760
        %v566 = vsub.f32 %v182, %v565
        %567 = vmatprep.subr.mxu0 %v566
        %v568 = vand.u32 %v181, 4294901760
        %v569 = vsub.f32 %v181, %v568
        %570 = vmatpush1.msra.mxu0 %v569
        %v571 = vand.u32 %v184, 4294901760
        %v572 = vsub.f32 %v184, %v571
        %573 = vmatprep.subr.mxu0 %v572
        %v574 = vand.u32 %v183, 4294901760
        %v575 = vsub.f32 %v183, %v574
        %576 = vmatpush1.msra.mxu0 %v575
        %v577 = vand.u32 %v186, 4294901760
        %v578 = vsub.f32 %v186, %v577
        %579 = vmatprep.subr.mxu0 %v578
        %v580 = vand.u32 %v185, 4294901760
        %v581 = vsub.f32 %v185, %v580
        %582 = vmatpush1.msra.mxu0 %v581
        %v583 = vand.u32 %v188, 4294901760
        %v584 = vsub.f32 %v188, %v583
        %585 = vmatprep.subr.mxu0 %v584
        %v586 = vand.u32 %v187, 4294901760
        %v587 = vsub.f32 %v187, %v586
        %588 = vmatpush1.msra.mxu0 %v587
        %v589 = vand.u32 %v190, 4294901760
        %v590 = vsub.f32 %v190, %v589
        %591 = vmatprep.subr.mxu0 %v590
        %v592 = vand.u32 %v189, 4294901760
        %v593 = vsub.f32 %v189, %v592
        %594 = vmatpush1.msra.mxu0 %v593
        %v595 = vand.u32 %v192, 4294901760
        %v596 = vsub.f32 %v192, %v595
        %597 = vmatprep.subr.mxu0 %v596
        %v598 = vand.u32 %v191, 4294901760
        %v599 = vsub.f32 %v191, %v598
        %600 = vmatpush1.msra.mxu0 %v599
        %v601 = vand.u32 %v194, 4294901760
        %v602 = vsub.f32 %v194, %v601
        %603 = vmatprep.subr.mxu0 %v602
        %v604 = vand.u32 %v193, 4294901760
        %v605 = vsub.f32 %v193, %v604
        %606 = vmatpush1.msra.mxu0 %v605
        %v607 = vand.u32 %v196, 4294901760
        %v608 = vsub.f32 %v196, %v607
        %609 = vmatprep.subr.mxu0 %v608
        %v610 = vand.u32 %v195, 4294901760
        %v611 = vsub.f32 %v195, %v610
        %612 = vmatpush1.msra.mxu0 %v611
        %v613 = vand.u32 %v198, 4294901760
        %v614 = vsub.f32 %v198, %v613
        %615 = vmatprep.subr.mxu0 %v614
        %v616 = vand.u32 %v197, 4294901760
        %v617 = vsub.f32 %v197, %v616
        %618 = vmatpush1.msra.mxu0 %v617
        %v619 = vand.u32 %v200, 4294901760
        %v620 = vsub.f32 %v200, %v619
        %621 = vmatprep.subr.mxu0 %v620
        %v622 = vand.u32 %v199, 4294901760
        %v623 = vsub.f32 %v199, %v622
        %624 = vmatpush1.msra.mxu0 %v623
        %v625 = vand.u32 %v202, 4294901760
        %v626 = vsub.f32 %v202, %v625
        %627 = vmatprep.subr.mxu0 %v626
        %v628 = vand.u32 %v201, 4294901760
        %v629 = vsub.f32 %v201, %v628
        %630 = vmatpush1.msra.mxu0 %v629
        %v631 = vand.u32 %v204, 4294901760
        %v632 = vsub.f32 %v204, %v631
        %633 = vmatprep.subr.mxu0 %v632
        %v634 = vand.u32 %v203, 4294901760
        %v635 = vsub.f32 %v203, %v634
        %636 = vmatpush1.msra.mxu0 %v635
        %v637 = vand.u32 %v206, 4294901760
        %v638 = vsub.f32 %v206, %v637
        %639 = vmatprep.subr.mxu0 %v638
        %v640 = vand.u32 %v205, 4294901760
        %v641 = vsub.f32 %v205, %v640
        %642 = vmatpush1.msra.mxu0 %v641
        %643 = vmatprep.subr.mxu0 0.0
        %644 = vmatpush1.msra.mxu0 0.0
        %645 = vmatprep.subr.mxu0 0.0
        %646 = vmatpush1.msra.mxu0 0.0
        %647 = vmatprep.subr.mxu0 0.0
        %648 = vmatpush1.msra.mxu0 0.0
        %649 = vmatprep.subr.mxu0 0.0
        %650 = vmatpush1.msra.mxu0 0.0
        %651 = vmatprep.subr.mxu0 0.0
        %652 = vmatpush1.msra.mxu0 0.0
        %653 = vmatprep.subr.mxu0 0.0
        %654 = vmatpush1.msra.mxu0 0.0
        %655 = vmatprep.subr.mxu0 0.0
        %656 = vmatpush1.msra.mxu0 0.0
        %657 = vmatprep.subr.mxu0 0.0
        %658 = vmatpush1.msra.mxu0 0.0
        %659 = vmatprep.subr.mxu0 0.0
        %660 = vmatpush1.msra.mxu0 0.0
        %661 = vmatprep.subr.mxu0 0.0
        %662 = vmatpush1.msra.mxu0 0.0
        %663 = vmatprep.subr.mxu0 0.0
        %664 = vmatpush1.msra.mxu0 0.0
        %665 = vmatprep.subr.mxu0 0.0
        %666 = vmatpush1.msra.mxu0 0.0
        %667 = vmatprep.subr.mxu0 0.0
        %668 = vmatpush1.msra.mxu0 0.0
        %669 = vmatprep.subr.mxu0 0.0
        %670 = vmatpush1.msra.mxu0 0.0
        %671 = vmatprep.subr.mxu0 0.0
        %672 = vmatpush1.msra.mxu0 0.0
        %673 = vmatprep.subr.mxu0 0.0
        %674 = vmatpush1.msra.mxu0 0.0
        %675 = vmatprep.mubr.f32.mxu0 0.0
        %v676 = vand.u32 %v174, 4294901760
        %v677 = vsub.f32 %v174, %v676
        %678 = vmatmul.mubr.f32.gmra.mrb[0].mxu0 %v677
        %v679 = vpop.f32.mrb[0].mxu0
        %v680 = vadd.f32 %v543, %v679
        %v681 = vpop.f32.mrb[0].mxu0
        %v682 = vadd.f32 %v545, %v681
        %683 = vdwg.mxu0
        %v684 = vand.u32 %v176, 4294901760
        %685 = vmatprep.subr.mxu0 %v684
        %v686 = vand.u32 %v175, 4294901760
        %687 = vmatpush1.msra.mxu0 %v686
        %v688 = vand.u32 %v178, 4294901760
        %689 = vmatprep.subr.mxu0 %v688
        %v690 = vand.u32 %v177, 4294901760
        %691 = vmatpush1.msra.mxu0 %v690
        %v692 = vand.u32 %v180, 4294901760
        %693 = vmatprep.subr.mxu0 %v692
        %v694 = vand.u32 %v179, 4294901760
        %695 = vmatpush1.msra.mxu0 %v694
        %v696 = vand.u32 %v182, 4294901760
        %697 = vmatprep.subr.mxu0 %v696
        %v698 = vand.u32 %v181, 4294901760
        %699 = vmatpush1.msra.mxu0 %v698
        %v700 = vand.u32 %v184, 4294901760
        %701 = vmatprep.subr.mxu0 %v700
        %v702 = vand.u32 %v183, 4294901760
        %703 = vmatpush1.msra.mxu0 %v702
        %v704 = vand.u32 %v186, 4294901760
        %705 = vmatprep.subr.mxu0 %v704
        %v706 = vand.u32 %v185, 4294901760
        %707 = vmatpush1.msra.mxu0 %v706
        %v708 = vand.u32 %v188, 4294901760
        %709 = vmatprep.subr.mxu0 %v708
        %v710 = vand.u32 %v187, 4294901760
        %711 = vmatpush1.msra.mxu0 %v710
        %v712 = vand.u32 %v190, 4294901760
        %713 = vmatprep.subr.mxu0 %v712
        %v714 = vand.u32 %v189, 4294901760
        %715 = vmatpush1.msra.mxu0 %v714
        %v716 = vand.u32 %v192, 4294901760
        %717 = vmatprep.subr.mxu0 %v716
        %v718 = vand.u32 %v191, 4294901760
        %719 = vmatpush1.msra.mxu0 %v718
        %v720 = vand.u32 %v194, 4294901760
        %721 = vmatprep.subr.mxu0 %v720
        %v722 = vand.u32 %v193, 4294901760
        %723 = vmatpush1.msra.mxu0 %v722
        %v724 = vand.u32 %v196, 4294901760
        %725 = vmatprep.subr.mxu0 %v724
        %v726 = vand.u32 %v195, 4294901760
        %727 = vmatpush1.msra.mxu0 %v726
        %v728 = vand.u32 %v198, 4294901760
        %729 = vmatprep.subr.mxu0 %v728
        %v730 = vand.u32 %v197, 4294901760
        %731 = vmatpush1.msra.mxu0 %v730
        %v732 = vand.u32 %v200, 4294901760
        %733 = vmatprep.subr.mxu0 %v732
        %v734 = vand.u32 %v199, 4294901760
        %735 = vmatpush1.msra.mxu0 %v734
        %v736 = vand.u32 %v202, 4294901760
        %737 = vmatprep.subr.mxu0 %v736
        %v738 = vand.u32 %v201, 4294901760
        %739 = vmatpush1.msra.mxu0 %v738
        %v740 = vand.u32 %v204, 4294901760
        %741 = vmatprep.subr.mxu0 %v740
        %v742 = vand.u32 %v203, 4294901760
        %743 = vmatpush1.msra.mxu0 %v742
        %v744 = vand.u32 %v206, 4294901760
        %745 = vmatprep.subr.mxu0 %v744
        %v746 = vand.u32 %v205, 4294901760
        %747 = vmatpush1.msra.mxu0 %v746
        %748 = vmatprep.subr.mxu0 0.0
        %749 = vmatpush1.msra.mxu0 0.0
        %750 = vmatprep.subr.mxu0 0.0
        %751 = vmatpush1.msra.mxu0 0.0
        %752 = vmatprep.subr.mxu0 0.0
        %753 = vmatpush1.msra.mxu0 0.0
        %754 = vmatprep.subr.mxu0 0.0
        %755 = vmatpush1.msra.mxu0 0.0
        %756 = vmatprep.subr.mxu0 0.0
        %757 = vmatpush1.msra.mxu0 0.0
        %758 = vmatprep.subr.mxu0 0.0
        %759 = vmatpush1.msra.mxu0 0.0
        %760 = vmatprep.subr.mxu0 0.0
        %761 = vmatpush1.msra.mxu0 0.0
        %762 = vmatprep.subr.mxu0 0.0
        %763 = vmatpush1.msra.mxu0 0.0
        %764 = vmatprep.subr.mxu0 0.0
        %765 = vmatpush1.msra.mxu0 0.0
        %766 = vmatprep.subr.mxu0 0.0
        %767 = vmatpush1.msra.mxu0 0.0
        %768 = vmatprep.subr.mxu0 0.0
        %769 = vmatpush1.msra.mxu0 0.0
        %770 = vmatprep.subr.mxu0 0.0
        %771 = vmatpush1.msra.mxu0 0.0
        %772 = vmatprep.subr.mxu0 0.0
        %773 = vmatpush1.msra.mxu0 0.0
        %774 = vmatprep.subr.mxu0 0.0
        %775 = vmatpush1.msra.mxu0 0.0
        %776 = vmatprep.subr.mxu0 0.0
        %777 = vmatpush1.msra.mxu0 0.0
        %778 = vmatprep.subr.mxu0 0.0
        %779 = vmatpush1.msra.mxu0 0.0
        %780 = vmatprep.mubr.f32.mxu0 0.0
        %v781 = vand.u32 %v174, 4294901760
        %v782 = vsub.f32 %v174, %v781
        %v783 = vand.u32 %v782, 4294901760
        %784 = vmatmul.mubr.f32.gmra.mrb[0].mxu0 %v783
        %v785 = vpop.f32.mrb[0].mxu0
        %v786 = vadd.f32 %v680, %v785
        %v787 = vpop.f32.mrb[0].mxu0
        %v788 = vadd.f32 %v682, %v787
        %789 = vdwg.mxu0
        %v790 = vand.u32 %v176, 4294901760
        %v791 = vsub.f32 %v176, %v790
        %v792 = vand.u32 %v791, 4294901760
        %793 = vmatprep.subr.mxu0 %v792
        %v794 = vand.u32 %v175, 4294901760
        %v795 = vsub.f32 %v175, %v794
        %v796 = vand.u32 %v795, 4294901760
        %797 = vmatpush1.msra.mxu0 %v796
        %v798 = vand.u32 %v178, 4294901760
        %v799 = vsub.f32 %v178, %v798
        %v800 = vand.u32 %v799, 4294901760
        %801 = vmatprep.subr.mxu0 %v800
        %v802 = vand.u32 %v177, 4294901760
        %v803 = vsub.f32 %v177, %v802
        %v804 = vand.u32 %v803, 4294901760
        %805 = vmatpush1.msra.mxu0 %v804
        %v806 = vand.u32 %v180, 4294901760
        %v807 = vsub.f32 %v180, %v806
        %v808 = vand.u32 %v807, 4294901760
        %809 = vmatprep.subr.mxu0 %v808
        %v810 = vand.u32 %v179, 4294901760
        %v811 = vsub.f32 %v179, %v810
        %v812 = vand.u32 %v811, 4294901760
        %813 = vmatpush1.msra.mxu0 %v812
        %v814 = vand.u32 %v182, 4294901760
        %v815 = vsub.f32 %v182, %v814
        %v816 = vand.u32 %v815, 4294901760
        %817 = vmatprep.subr.mxu0 %v816
        %v818 = vand.u32 %v181, 4294901760
        %v819 = vsub.f32 %v181, %v818
        %v820 = vand.u32 %v819, 4294901760
        %821 = vmatpush1.msra.mxu0 %v820
        %v822 = vand.u32 %v184, 4294901760
        %v823 = vsub.f32 %v184, %v822
        %v824 = vand.u32 %v823, 4294901760
        %825 = vmatprep.subr.mxu0 %v824
        %v826 = vand.u32 %v183, 4294901760
        %v827 = vsub.f32 %v183, %v826
        %v828 = vand.u32 %v827, 4294901760
        %829 = vmatpush1.msra.mxu0 %v828
        %v830 = vand.u32 %v186, 4294901760
        %v831 = vsub.f32 %v186, %v830
        %v832 = vand.u32 %v831, 4294901760
        %833 = vmatprep.subr.mxu0 %v832
        %v834 = vand.u32 %v185, 4294901760
        %v835 = vsub.f32 %v185, %v834
        %v836 = vand.u32 %v835, 4294901760
        %837 = vmatpush1.msra.mxu0 %v836
        %v838 = vand.u32 %v188, 4294901760
        %v839 = vsub.f32 %v188, %v838
        %v840 = vand.u32 %v839, 4294901760
        %841 = vmatprep.subr.mxu0 %v840
        %v842 = vand.u32 %v187, 4294901760
        %v843 = vsub.f32 %v187, %v842
        %v844 = vand.u32 %v843, 4294901760
        %845 = vmatpush1.msra.mxu0 %v844
        %v846 = vand.u32 %v190, 4294901760
        %v847 = vsub.f32 %v190, %v846
        %v848 = vand.u32 %v847, 4294901760
        %849 = vmatprep.subr.mxu0 %v848
        %v850 = vand.u32 %v189, 4294901760
        %v851 = vsub.f32 %v189, %v850
        %v852 = vand.u32 %v851, 4294901760
        %853 = vmatpush1.msra.mxu0 %v852
        %v854 = vand.u32 %v192, 4294901760
        %v855 = vsub.f32 %v192, %v854
        %v856 = vand.u32 %v855, 4294901760
        %857 = vmatprep.subr.mxu0 %v856
        %v858 = vand.u32 %v191, 4294901760
        %v859 = vsub.f32 %v191, %v858
        %v860 = vand.u32 %v859, 4294901760
        %861 = vmatpush1.msra.mxu0 %v860
        %v862 = vand.u32 %v194, 4294901760
        %v863 = vsub.f32 %v194, %v862
        %v864 = vand.u32 %v863, 4294901760
        %865 = vmatprep.subr.mxu0 %v864
        %v866 = vand.u32 %v193, 4294901760
        %v867 = vsub.f32 %v193, %v866
        %v868 = vand.u32 %v867, 4294901760
        %869 = vmatpush1.msra.mxu0 %v868
        %v870 = vand.u32 %v196, 4294901760
        %v871 = vsub.f32 %v196, %v870
        %v872 = vand.u32 %v871, 4294901760
        %873 = vmatprep.subr.mxu0 %v872
        %v874 = vand.u32 %v195, 4294901760
        %v875 = vsub.f32 %v195, %v874
        %v876 = vand.u32 %v875, 4294901760
        %877 = vmatpush1.msra.mxu0 %v876
        %v878 = vand.u32 %v198, 4294901760
        %v879 = vsub.f32 %v198, %v878
        %v880 = vand.u32 %v879, 4294901760
        %881 = vmatprep.subr.mxu0 %v880
        %v882 = vand.u32 %v197, 4294901760
        %v883 = vsub.f32 %v197, %v882
        %v884 = vand.u32 %v883, 4294901760
        %885 = vmatpush1.msra.mxu0 %v884
        %v886 = vand.u32 %v200, 4294901760
        %v887 = vsub.f32 %v200, %v886
        %v888 = vand.u32 %v887, 4294901760
        %889 = vmatprep.subr.mxu0 %v888
        %v890 = vand.u32 %v199, 4294901760
        %v891 = vsub.f32 %v199, %v890
        %v892 = vand.u32 %v891, 4294901760
        %893 = vmatpush1.msra.mxu0 %v892
        %v894 = vand.u32 %v202, 4294901760
        %v895 = vsub.f32 %v202, %v894
        %v896 = vand.u32 %v895, 4294901760
        %897 = vmatprep.subr.mxu0 %v896
        %v898 = vand.u32 %v201, 4294901760
        %v899 = vsub.f32 %v201, %v898
        %v900 = vand.u32 %v899, 4294901760
        %901 = vmatpush1.msra.mxu0 %v900
        %v902 = vand.u32 %v204, 4294901760
        %v903 = vsub.f32 %v204, %v902
        %v904 = vand.u32 %v903, 4294901760
        %905 = vmatprep.subr.mxu0 %v904
        %v906 = vand.u32 %v203, 4294901760
        %v907 = vsub.f32 %v203, %v906
        %v908 = vand.u32 %v907, 4294901760
        %909 = vmatpush1.msra.mxu0 %v908
        %v910 = vand.u32 %v206, 4294901760
        %v911 = vsub.f32 %v206, %v910
        %v912 = vand.u32 %v911, 4294901760
        %913 = vmatprep.subr.mxu0 %v912
        %v914 = vand.u32 %v205, 4294901760
        %v915 = vsub.f32 %v205, %v914
        %v916 = vand.u32 %v915, 4294901760
        %917 = vmatpush1.msra.mxu0 %v916
        %918 = vmatprep.subr.mxu0 0.0
        %919 = vmatpush1.msra.mxu0 0.0
        %920 = vmatprep.subr.mxu0 0.0
        %921 = vmatpush1.msra.mxu0 0.0
        %922 = vmatprep.subr.mxu0 0.0
        %923 = vmatpush1.msra.mxu0 0.0
        %924 = vmatprep.subr.mxu0 0.0
        %925 = vmatpush1.msra.mxu0 0.0
        %926 = vmatprep.subr.mxu0 0.0
        %927 = vmatpush1.msra.mxu0 0.0
        %928 = vmatprep.subr.mxu0 0.0
        %929 = vmatpush1.msra.mxu0 0.0
        %930 = vmatprep.subr.mxu0 0.0
        %931 = vmatpush1.msra.mxu0 0.0
        %932 = vmatprep.subr.mxu0 0.0
        %933 = vmatpush1.msra.mxu0 0.0
        %934 = vmatprep.subr.mxu0 0.0
        %935 = vmatpush1.msra.mxu0 0.0
        %936 = vmatprep.subr.mxu0 0.0
        %937 = vmatpush1.msra.mxu0 0.0
        %938 = vmatprep.subr.mxu0 0.0
        %939 = vmatpush1.msra.mxu0 0.0
        %940 = vmatprep.subr.mxu0 0.0
        %941 = vmatpush1.msra.mxu0 0.0
        %942 = vmatprep.subr.mxu0 0.0
        %943 = vmatpush1.msra.mxu0 0.0
        %944 = vmatprep.subr.mxu0 0.0
        %945 = vmatpush1.msra.mxu0 0.0
        %946 = vmatprep.subr.mxu0 0.0
        %947 = vmatpush1.msra.mxu0 0.0
        %948 = vmatprep.subr.mxu0 0.0
        %949 = vmatpush1.msra.mxu0 0.0
        %950 = vmatprep.mubr.f32.mxu0 0.0
        %v951 = vand.u32 %v174, 4294901760
        %952 = vmatmul.mubr.f32.gmra.mrb[0].mxu0 %v951
        %v953 = vpop.f32.mrb[0].mxu0
        %v954 = vadd.f32 %v786, %v953
        %v955 = vpop.f32.mrb[0].mxu0
        %v956 = vadd.f32 %v788, %v955
        %957 = vdwg.mxu0
        %v958 = vand.u32 %v176, 4294901760
        %959 = vmatprep.subr.mxu0 %v958
        %v960 = vand.u32 %v175, 4294901760
        %961 = vmatpush1.msra.mxu0 %v960
        %v962 = vand.u32 %v178, 4294901760
        %963 = vmatprep.subr.mxu0 %v962
        %v964 = vand.u32 %v177, 4294901760
        %965 = vmatpush1.msra.mxu0 %v964
        %v966 = vand.u32 %v180, 4294901760
        %967 = vmatprep.subr.mxu0 %v966
        %v968 = vand.u32 %v179, 4294901760
        %969 = vmatpush1.msra.mxu0 %v968
        %v970 = vand.u32 %v182, 4294901760
        %971 = vmatprep.subr.mxu0 %v970
        %v972 = vand.u32 %v181, 4294901760
        %973 = vmatpush1.msra.mxu0 %v972
        %v974 = vand.u32 %v184, 4294901760
        %975 = vmatprep.subr.mxu0 %v974
        %v976 = vand.u32 %v183, 4294901760
        %977 = vmatpush1.msra.mxu0 %v976
        %v978 = vand.u32 %v186, 4294901760
        %979 = vmatprep.subr.mxu0 %v978
        %v980 = vand.u32 %v185, 4294901760
        %981 = vmatpush1.msra.mxu0 %v980
        %v982 = vand.u32 %v188, 4294901760
        %983 = vmatprep.subr.mxu0 %v982
        %v984 = vand.u32 %v187, 4294901760
        %985 = vmatpush1.msra.mxu0 %v984
        %v986 = vand.u32 %v190, 4294901760
        %987 = vmatprep.subr.mxu0 %v986
        %v988 = vand.u32 %v189, 4294901760
        %989 = vmatpush1.msra.mxu0 %v988
        %v990 = vand.u32 %v192, 4294901760
        %991 = vmatprep.subr.mxu0 %v990
        %v992 = vand.u32 %v191, 4294901760
        %993 = vmatpush1.msra.mxu0 %v992
        %v994 = vand.u32 %v194, 4294901760
        %995 = vmatprep.subr.mxu0 %v994
        %v996 = vand.u32 %v193, 4294901760
        %997 = vmatpush1.msra.mxu0 %v996
        %v998 = vand.u32 %v196, 4294901760
        %999 = vmatprep.subr.mxu0 %v998
        %v1000 = vand.u32 %v195, 4294901760
        %1001 = vmatpush1.msra.mxu0 %v1000
        %v1002 = vand.u32 %v198, 4294901760
        %1003 = vmatprep.subr.mxu0 %v1002
        %v1004 = vand.u32 %v197, 4294901760
        %1005 = vmatpush1.msra.mxu0 %v1004
        %v1006 = vand.u32 %v200, 4294901760
        %1007 = vmatprep.subr.mxu0 %v1006
        %v1008 = vand.u32 %v199, 4294901760
        %1009 = vmatpush1.msra.mxu0 %v1008
        %v1010 = vand.u32 %v202, 4294901760
        %1011 = vmatprep.subr.mxu0 %v1010
        %v1012 = vand.u32 %v201, 4294901760
        %1013 = vmatpush1.msra.mxu0 %v1012
        %v1014 = vand.u32 %v204, 4294901760
        %1015 = vmatprep.subr.mxu0 %v1014
        %v1016 = vand.u32 %v203, 4294901760
        %1017 = vmatpush1.msra.mxu0 %v1016
        %v1018 = vand.u32 %v206, 4294901760
        %1019 = vmatprep.subr.mxu0 %v1018
        %v1020 = vand.u32 %v205, 4294901760
        %1021 = vmatpush1.msra.mxu0 %v1020
        %1022 = vmatprep.subr.mxu0 0.0
        %1023 = vmatpush1.msra.mxu0 0.0
        %1024 = vmatprep.subr.mxu0 0.0
        %1025 = vmatpush1.msra.mxu0 0.0
        %1026 = vmatprep.subr.mxu0 0.0
        %1027 = vmatpush1.msra.mxu0 0.0
        %1028 = vmatprep.subr.mxu0 0.0
        %1029 = vmatpush1.msra.mxu0 0.0
        %1030 = vmatprep.subr.mxu0 0.0
        %1031 = vmatpush1.msra.mxu0 0.0
        %1032 = vmatprep.subr.mxu0 0.0
        %1033 = vmatpush1.msra.mxu0 0.0
        %1034 = vmatprep.subr.mxu0 0.0
        %1035 = vmatpush1.msra.mxu0 0.0
        %1036 = vmatprep.subr.mxu0 0.0
        %1037 = vmatpush1.msra.mxu0 0.0
        %1038 = vmatprep.subr.mxu0 0.0
        %1039 = vmatpush1.msra.mxu0 0.0
        %1040 = vmatprep.subr.mxu0 0.0
        %1041 = vmatpush1.msra.mxu0 0.0
        %1042 = vmatprep.subr.mxu0 0.0
        %1043 = vmatpush1.msra.mxu0 0.0
        %1044 = vmatprep.subr.mxu0 0.0
        %1045 = vmatpush1.msra.mxu0 0.0
        %1046 = vmatprep.subr.mxu0 0.0
        %1047 = vmatpush1.msra.mxu0 0.0
        %1048 = vmatprep.subr.mxu0 0.0
        %1049 = vmatpush1.msra.mxu0 0.0
        %1050 = vmatprep.subr.mxu0 0.0
        %1051 = vmatpush1.msra.mxu0 0.0
        %1052 = vmatprep.subr.mxu0 0.0
        %1053 = vmatpush1.msra.mxu0 0.0
        %1054 = vmatprep.mubr.f32.mxu0 0.0
        %v1055 = vand.u32 %v174, 4294901760
        %1056 = vmatmul.mubr.f32.gmra.mrb[0].mxu0 %v1055
        %v1057 = vpop.f32.mrb[0].mxu0
        %v1058 = vadd.f32 %v954, %v1057
        %v1059 = vpop.f32.mrb[0].mxu0
        %v1060 = vadd.f32 %v956, %v1059
        %1061 = vdwg.mxu0
        %1062 = vst [vmem:[%s173] sm:$0xff] %v1058
        %1063 = vst [vmem:[%s173 + $0x8] sm:$0xff] %v1060
        %s1064 = sand.u32 %s75, 1
        %s1065 = scalar_lea.sflag [#allocation4], %s1064
        %s1066 = sand.u32 %s75, 1
        %s1067 = smul.addr %s1066, 16
        %s1068 = scalar_lea.vmem [#allocation7], %s1067
        // Predicated region
        $region37: #{tpu_custom_call.1} parent=27 // pred_check
          %p1069 = pneg %p85
        $region38: #{tpu_custom_call.1} parent=27 // pred_check_branch
          %1071 = sbr.rel (%p1069) target = $region40
        $region39: #{tpu_custom_call.1} parent=27 // pred_region
          %s1073 = ssub.s32 256, 256
          %1074 = vsyncadd %s1065, %s1073
          %s1075 = smul.addr %s20, 2
          %s1076 = smul.addr %s1075, 128
          %s1077 = scalar_lea.hbm %s2, %s1076
          %s1079 = sshll.u32 %s1068, 4
          %s1080 = int_to_ptr.vmem [resolvable:$true] %s1079
          %1082 = dma.vmem_to_hbm [thread:$0]  %s1080, 256, %s1077, %s1065
        $region40: #{tpu_custom_call.1} parent=27 // pred_fallthru
          _
      $region28: #{tpu_custom_call.1} parent=5 // pred_fallthru
        _
      %p1083 = scmp.le.s32.totalorder 2, %s15
      // Predicated region
      $region41: #{tpu_custom_call.1} parent=5 // pred_check
        %p1084 = pneg %p1083
      $region42: #{tpu_custom_call.1} parent=5 // pred_check_branch
        %1086 = sbr.rel (%p1084) target = $region44
      $region43: #{tpu_custom_call.1} parent=5 // pred_region
        %s1087 = ssub.s32 %s15, 2
        // Predicated region
        $region45: #{tpu_custom_call.1} parent=43 // pred_check
          %p1088 = pneg %p91
        $region46: #{tpu_custom_call.1} parent=43 // pred_check_branch
          %1090 = sbr.rel (%p1088) target = $region48
        $region47: #{tpu_custom_call.1} parent=43 // pred_region
          %s1091 = sand.u32 %s76, 1
          %s1092 = scalar_lea.sflag [#allocation4], %s1091
          %s1093 = sand.u32 %s76, 1
          %s1094 = smul.addr %s1093, 16
          %s1095 = scalar_lea.vmem [#allocation7], %s1094
          %1096 = dma.done %s1092, 256
        $region48: #{tpu_custom_call.1} parent=43 // pred_fallthru
          _
      $region44: #{tpu_custom_call.1} parent=5 // pred_fallthru
        _
    $region6: #{tpu_custom_call.1} parent=1 // loop_footer
      %s19 = sadd.s32 1, %s15
    $region7: #{tpu_custom_call.1} parent=1 // loop_footer_branch
      %14 = sbr.rel target = $region3
    $region8: #{tpu_custom_call.1} parent=1 // loop_exit
      _
    %1097 = vsyncpa [#allocation3], 1
    %s1098 = scalar_lea.sflag [#allocation3], 1
    %1099 = vsyncpa %s1098, 1
    %1100 = vsyncpa [#allocation6], 1
    %1101 = vsyncpa [#allocation4], 1
    %s1102 = scalar_lea.sflag [#allocation4], 1
    %1103 = vsyncpa %s1102, 1

</llo_original>
